<compile_context>
chip_gen: v5e
topology: v5e:2x2
jax: 0.10.0
libtpu: 0.0.40
codegen_flags: <defaults>
</compile_context>

<pallas_src>
import functools

import numpy as np
import jax
import jax.numpy as jnp
from jax.experimental import pallas as pl
from jax.experimental.pallas import tpu as pltpu


_LANE = 128
_SUBLANE = 8


def _ce_ohem_kernel(labels_ref, logits_ref, loss_ref, stats_ref, *,
                    ignore_lb, thresh_val):
    """Per-pixel cross-entropy on (rows, 128) sublane/lane-dense pixel tiles,
    plus lane-dense per-tile OHEM threshold partials."""
    xin = logits_ref[...]                          # (C, TR, 128) native dtype
    lbl = labels_ref[...].astype(jnp.int32)        # (TR, 128)
    num_classes = xin.shape[0]

    # Numerically stable log-sum-exp across the class axis.  The max over the
    # (small, leading) class axis is C-1 packed VPU maxima; exp / label gather
    # run on dense (rows, 128) slabs so the EUP stays fed and no full
    # (C, TR, 128) f32 temporary is materialized.
    m = jnp.max(xin, axis=0).astype(jnp.float32)   # (TR, 128)
    s = jnp.zeros_like(m)
    g = jnp.zeros_like(m)
    for c in range(num_classes):
        row = xin[c].astype(jnp.float32)           # dense (TR, 128) slab
        s = s + jnp.exp(row - m)
        g = g + jnp.where(lbl == c, row, 0.0)
    raw = m + jnp.log(s) - g                       # (TR, 128), always >= 0

    # Ignored labels (and wrapper-side padding, which carries ignore_lb) get
    # loss 0, matching torch CE(reduction='none', ignore_index=ignore_lb).
    loss = jnp.where(lbl != ignore_lb, raw, 0.0)
    loss_ref[...] = loss                           # dense unmasked store

    # Lane-dense per-tile partials for the OHEM threshold branch: reduce only
    # over the sublane/row axis; the final 128-lane reduce happens outside.
    #   row 0: per-lane sum of loss where loss > thresh
    #   row 1: per-lane count of loss > thresh
    gt = loss > thresh_val
    stats_ref[0:1, :] = jnp.sum(jnp.where(gt, loss, 0.0), axis=0, keepdims=True)
    stats_ref[1:2, :] = jnp.sum(gt.astype(jnp.float32), axis=0, keepdims=True)


def _pick_tile_rows(num_classes):
    # Target ~2 MiB of f32 logits math per tile: large enough to amortize the
    # ~0.35 us per-grid-step overhead and stream HBM near roofline, small
    # enough that the double-buffered pipeline (2x logits + labels + loss
    # blocks) plus f32 temporaries stays well inside v7x's 64 MiB physical
    # VMEM (and the 32 MiB limit requested below).
    budget = 2 * 1024 * 1024
    t = budget // max(1, num_classes * _LANE * 4)
    t = max(_SUBLANE, min(int(t), 1024))
    return (t // _SUBLANE) * _SUBLANE


def _per_pixel_ce_and_stats(logits_nchw, labels_nhw, *, ignore_lb, thresh_val):
    N, C, H, W = logits_nchw.shape
    HW = H * W
    rows = -(-HW // _LANE)                         # pixels as (rows, 128)

    tile_rows = _pick_tile_rows(C)
    if rows <= tile_rows:
        tile_rows = rows                           # block == full dim is legal
        rows_pad = rows
    else:
        rows_pad = -(-rows // tile_rows) * tile_rows
    num_tiles = rows_pad // tile_rows
    hw_pad = rows_pad * _LANE

    # Free reshapes only in the common (aligned) case; one cheap pad otherwise.
    # Padded pixels carry ignore_lb so they contribute 0 loss and are excluded
    # from the threshold statistics.
    logits = logits_nchw.reshape(N, C, HW)
    labels = labels_nhw.reshape(N, HW)
    if hw_pad != HW:
        logits = jnp.pad(logits, ((0, 0), (0, 0), (0, hw_pad - HW)))
        labels = jnp.pad(labels, ((0, 0), (0, hw_pad - HW)),
                         constant_values=ignore_lb)
    logits = logits.reshape(N, C, rows_pad, _LANE)
    labels = labels.reshape(N, rows_pad, _LANE)

    kernel = functools.partial(_ce_ohem_kernel,
                               ignore_lb=ignore_lb, thresh_val=thresh_val)

    loss, stats = pl.pallas_call(
        kernel,
        out_shape=(
            jax.ShapeDtypeStruct((N, rows_pad, _LANE), jnp.float32),
            jax.ShapeDtypeStruct((N, num_tiles, 2, _LANE), jnp.float32),
        ),
        grid_spec=pltpu.PrefetchScalarGridSpec(
            num_scalar_prefetch=0,
            grid=(N, num_tiles),
            in_specs=[
                pl.BlockSpec((None, tile_rows, _LANE),
                             lambda n, p: (n, p, 0)),
                pl.BlockSpec((None, C, tile_rows, _LANE),
                             lambda n, p: (n, 0, p, 0)),
            ],
            out_specs=(
                pl.BlockSpec((None, tile_rows, _LANE),
                             lambda n, p: (n, p, 0)),
                pl.BlockSpec((None, None, 2, _LANE),
                             lambda n, p: (n, p, 0, 0)),
            ),
        ),
        compiler_params=pltpu.CompilerParams(
            dimension_semantics=("parallel", "parallel"),
            vmem_limit_bytes=32 * 1024 * 1024),
    )(labels, logits)
    return loss.reshape(-1), stats


def ohem_ce_loss_v1(logits_nchw, labels_nhw, *, thresh, n_min, ignore_lb=255):
    """Matches OhemCELossV1.forward(logits, labels)."""
    thresh_val = float(np.float32(-np.log(np.float32(thresh))))
    loss, stats = _per_pixel_ce_and_stats(
        logits_nchw, labels_nhw, ignore_lb=ignore_lb, thresh_val=thresh_val)

    sum_gt = jnp.sum(stats[:, :, 0, :])
    cnt_gt = jnp.sum(stats[:, :, 1, :].astype(jnp.int32))   # exact int count
    # sorted_desc[n_min] > thresh  <=>  more than n_min losses exceed thresh
    cond = cnt_gt > n_min
    mean_gt = sum_gt / jnp.maximum(cnt_gt, 1).astype(jnp.float32)

    def _fallback(_):
        # TODO(synk): the data-dependent top-n_min selection (descending sort)
        # has no clean Pallas equivalent; a histogram+cutoff pass fused into
        # the stats output would avoid this global top_k, but exact tie
        # handling keeps lax.top_k here for now.
        top, _ = jax.lax.top_k(loss, n_min)
        return jnp.mean(top)

    return jax.lax.cond(cond, lambda _: mean_gt, _fallback, operand=None)


def _reference(logits_nchw, labels_nhw, *, thresh, n_min, ignore_lb=255):
    """Pure-JAX reference mirroring the PyTorch module, for sanity checking."""
    N, C, H, W = logits_nchw.shape
    thresh_val = -jnp.log(jnp.asarray(thresh, dtype=jnp.float32))
    x = jnp.transpose(logits_nchw, (0, 2, 3, 1)).reshape(-1, C).astype(jnp.float32)
    y = labels_nhw.reshape(-1).astype(jnp.int32)
    logz = jax.nn.logsumexp(x, axis=-1)
    onehot = jax.nn.one_hot(jnp.where(y == ignore_lb, 0, y), C, dtype=x.dtype)
    gathered = jnp.sum(x * onehot, axis=-1)
    loss = jnp.where(y == ignore_lb, 0.0, logz - gathered)
    s = jnp.sort(loss)[::-1]
    cond = s[n_min] > thresh_val
    mask = s > thresh_val
    m1 = jnp.sum(jnp.where(mask, s, 0.0)) / jnp.maximum(jnp.sum(mask), 1)
    m2 = jnp.mean(s[:n_min])
    return jnp.where(cond, m1, m2)


if __name__ == "__main__":
    key = jax.random.PRNGKey(0)
    k1, k2, k3 = jax.random.split(key, 3)

    N, C, H, W = 2, 4, 16, 16
    logits = jax.random.normal(k1, (N, C, H, W), dtype=jnp.float32)
    labels = jax.random.randint(k2, (N, H, W), 0, C, dtype=jnp.int32)
    # sprinkle some ignore_lb=255 pixels
    ignore_mask = jax.random.bernoulli(k3, 0.1, (N, H, W))
    labels = jnp.where(ignore_mask, 255, labels)

    n_min = (N * H * W) // 16   # 32

    # thresh=0.7 exercises the threshold branch, thresh=0.01 the top-n_min
    # fallback branch.
    for thresh in (0.7, 0.01):
        out = ohem_ce_loss_v1(logits, labels, thresh=thresh, n_min=n_min)
        out = jax.block_until_ready(out)
        ref = _reference(logits, labels, thresh=thresh, n_min=n_min)
        assert jnp.allclose(out, ref, rtol=1e-5, atol=1e-5), (thresh, out, ref)

    print("KERNEL_OK")
</pallas_src>

<mosaic_0001>
module attributes {stable_mosaic.version = 11 : i64} {
  func.func @_ce_ohem_kernel(%arg0: i32, %arg1: i32, %arg2: memref<1x2x128xi32, #tpu.memory_space<vmem>>, %arg3: memref<1x4x2x128xf32, #tpu.memory_space<vmem>>, %arg4: memref<1x2x128xf32, #tpu.memory_space<vmem>>, %arg5: memref<1x1x2x128xf32, #tpu.memory_space<vmem>>) attributes {dimension_semantics = [#tpu.dimension_semantics<parallel>, #tpu.dimension_semantics<parallel>], iteration_bounds = array<i64: 2, 1>, scalar_prefetch = 0 : i64, scratch_operands = 0 : i64, tpu.core_type = #tpu.core_type<tc>, window_params = [{transform_indices = @transform_0, window_bounds = array<i64: 1, 2, 128>}, {transform_indices = @transform_1, window_bounds = array<i64: 1, 4, 2, 128>}, {transform_indices = @transform_2, window_bounds = array<i64: 1, 2, 128>}, {transform_indices = @transform_3, window_bounds = array<i64: 1, 1, 2, 128>}]} {
    %c0 = arith.constant 0 : index
    %c0_0 = arith.constant 0 : index
    %c0_1 = arith.constant 0 : index
    %c0_2 = arith.constant 0 : index
    %0 = vector.load %arg3[%c0, %c0_0, %c0_1, %c0_2] : memref<1x4x2x128xf32, #tpu.memory_space<vmem>>, vector<1x4x2x128xf32>
    %1 = vector.shape_cast %0 : vector<1x4x2x128xf32> to vector<4x2x128xf32>
    %c0_3 = arith.constant 0 : index
    %c0_4 = arith.constant 0 : index
    %c0_5 = arith.constant 0 : index
    %2 = vector.load %arg2[%c0_3, %c0_4, %c0_5] : memref<1x2x128xi32, #tpu.memory_space<vmem>>, vector<1x2x128xi32>
    %3 = vector.shape_cast %2 : vector<1x2x128xi32> to vector<2x128xi32>
    %cst = arith.constant dense<0xFF800000> : vector<2x128xf32>
    %4 = vector.multi_reduction <maximumf>, %1, %cst [0] : vector<4x2x128xf32> to vector<2x128xf32>
    %cst_6 = arith.constant 0.000000e+00 : f32
    %5 = vector.broadcast %cst_6 : f32 to vector<2x128xf32>
    %cst_7 = arith.constant 0.000000e+00 : f32
    %6 = vector.broadcast %cst_7 : f32 to vector<2x128xf32>
    %7 = vector.extract_strided_slice %1 {offsets = [0, 0, 0], sizes = [1, 2, 128], strides = [1, 1, 1]} : vector<4x2x128xf32> to vector<1x2x128xf32>
    %8 = vector.shape_cast %7 : vector<1x2x128xf32> to vector<2x128xf32>
    %9 = arith.subf %8, %4 : vector<2x128xf32>
    %10 = math.exp %9 : vector<2x128xf32>
    %11 = arith.addf %5, %10 : vector<2x128xf32>
    %c0_i32 = arith.constant 0 : i32
    %12 = vector.broadcast %c0_i32 : i32 to vector<2x128xi32>
    %13 = arith.cmpi eq, %3, %12 : vector<2x128xi32>
    %cst_8 = arith.constant 0.000000e+00 : f32
    %14 = vector.broadcast %cst_8 : f32 to vector<2x128xf32>
    %15 = arith.select %13, %8, %14 : vector<2x128xi1>, vector<2x128xf32>
    %16 = arith.addf %6, %15 : vector<2x128xf32>
    %17 = vector.extract_strided_slice %1 {offsets = [1, 0, 0], sizes = [1, 2, 128], strides = [1, 1, 1]} : vector<4x2x128xf32> to vector<1x2x128xf32>
    %18 = vector.shape_cast %17 : vector<1x2x128xf32> to vector<2x128xf32>
    %19 = arith.subf %18, %4 : vector<2x128xf32>
    %20 = math.exp %19 : vector<2x128xf32>
    %21 = arith.addf %11, %20 : vector<2x128xf32>
    %c1_i32 = arith.constant 1 : i32
    %22 = vector.broadcast %c1_i32 : i32 to vector<2x128xi32>
    %23 = arith.cmpi eq, %3, %22 : vector<2x128xi32>
    %cst_9 = arith.constant 0.000000e+00 : f32
    %24 = vector.broadcast %cst_9 : f32 to vector<2x128xf32>
    %25 = arith.select %23, %18, %24 : vector<2x128xi1>, vector<2x128xf32>
    %26 = arith.addf %16, %25 : vector<2x128xf32>
    %27 = vector.extract_strided_slice %1 {offsets = [2, 0, 0], sizes = [1, 2, 128], strides = [1, 1, 1]} : vector<4x2x128xf32> to vector<1x2x128xf32>
    %28 = vector.shape_cast %27 : vector<1x2x128xf32> to vector<2x128xf32>
    %29 = arith.subf %28, %4 : vector<2x128xf32>
    %30 = math.exp %29 : vector<2x128xf32>
    %31 = arith.addf %21, %30 : vector<2x128xf32>
    %c2_i32 = arith.constant 2 : i32
    %32 = vector.broadcast %c2_i32 : i32 to vector<2x128xi32>
    %33 = arith.cmpi eq, %3, %32 : vector<2x128xi32>
    %cst_10 = arith.constant 0.000000e+00 : f32
    %34 = vector.broadcast %cst_10 : f32 to vector<2x128xf32>
    %35 = arith.select %33, %28, %34 : vector<2x128xi1>, vector<2x128xf32>
    %36 = arith.addf %26, %35 : vector<2x128xf32>
    %37 = vector.extract_strided_slice %1 {offsets = [3, 0, 0], sizes = [1, 2, 128], strides = [1, 1, 1]} : vector<4x2x128xf32> to vector<1x2x128xf32>
    %38 = vector.shape_cast %37 : vector<1x2x128xf32> to vector<2x128xf32>
    %39 = arith.subf %38, %4 : vector<2x128xf32>
    %40 = math.exp %39 : vector<2x128xf32>
    %41 = arith.addf %31, %40 : vector<2x128xf32>
    %c3_i32 = arith.constant 3 : i32
    %42 = vector.broadcast %c3_i32 : i32 to vector<2x128xi32>
    %43 = arith.cmpi eq, %3, %42 : vector<2x128xi32>
    %cst_11 = arith.constant 0.000000e+00 : f32
    %44 = vector.broadcast %cst_11 : f32 to vector<2x128xf32>
    %45 = arith.select %43, %38, %44 : vector<2x128xi1>, vector<2x128xf32>
    %46 = arith.addf %36, %45 : vector<2x128xf32>
    %47 = math.log %41 : vector<2x128xf32>
    %48 = arith.addf %4, %47 : vector<2x128xf32>
    %49 = arith.subf %48, %46 : vector<2x128xf32>
    %c255_i32 = arith.constant 255 : i32
    %50 = vector.broadcast %c255_i32 : i32 to vector<2x128xi32>
    %51 = arith.cmpi ne, %3, %50 : vector<2x128xi32>
    %cst_12 = arith.constant 0.000000e+00 : f32
    %52 = vector.broadcast %cst_12 : f32 to vector<2x128xf32>
    %53 = arith.select %51, %49, %52 : vector<2x128xi1>, vector<2x128xf32>
    %c0_13 = arith.constant 0 : index
    %c0_14 = arith.constant 0 : index
    %c0_15 = arith.constant 0 : index
    %54 = vector.load %arg4[%c0_13, %c0_14, %c0_15] : memref<1x2x128xf32, #tpu.memory_space<vmem>>, vector<1x2x128xf32>
    %55 = vector.shape_cast %54 : vector<1x2x128xf32> to vector<2x128xf32>
    %56 = vector.shape_cast %53 : vector<2x128xf32> to vector<1x2x128xf32>
    tpu.vector_store %arg4[%c0_13, %c0_14, %c0_15], %56 {strides = array<i32>} : memref<1x2x128xf32, #tpu.memory_space<vmem>>, vector<1x2x128xf32>,
    %cst_16 = arith.constant 0.356674939 : f32
    %57 = vector.broadcast %cst_16 : f32 to vector<2x128xf32>
    %58 = arith.cmpf ogt, %53, %57 : vector<2x128xf32>
    %cst_17 = arith.constant 0.000000e+00 : f32
    %59 = vector.broadcast %cst_17 : f32 to vector<2x128xf32>
    %60 = arith.select %58, %53, %59 : vector<2x128xi1>, vector<2x128xf32>
    %cst_18 = arith.constant dense<0.000000e+00> : vector<128xf32>
    %61 = vector.multi_reduction <add>, %60, %cst_18 [0] : vector<2x128xf32> to vector<128xf32>
    %62 = vector.shape_cast %61 : vector<128xf32> to vector<1x128xf32>
    %c0_19 = arith.constant 0 : index
    %c0_20 = arith.constant 0 : index
    %c0_21 = arith.constant 0 : index
    %c0_22 = arith.constant 0 : index
    %63 = vector.load %arg5[%c0_19, %c0_20, %c0_21, %c0_22] : memref<1x1x2x128xf32, #tpu.memory_space<vmem>>, vector<1x1x1x128xf32>
    %64 = vector.shape_cast %63 : vector<1x1x1x128xf32> to vector<1x128xf32>
    %65 = vector.shape_cast %62 : vector<1x128xf32> to vector<1x1x1x128xf32>
    tpu.vector_store %arg5[%c0_19, %c0_20, %c0_21, %c0_22], %65 {strides = array<i32>} : memref<1x1x2x128xf32, #tpu.memory_space<vmem>>, vector<1x1x1x128xf32>,
    %66 = arith.extui %58 : vector<2x128xi1> to vector<2x128xi32>
    %67 = arith.sitofp %66 : vector<2x128xi32> to vector<2x128xf32>
    %cst_23 = arith.constant dense<0.000000e+00> : vector<128xf32>
    %68 = vector.multi_reduction <add>, %67, %cst_23 [0] : vector<2x128xf32> to vector<128xf32>
    %69 = vector.shape_cast %68 : vector<128xf32> to vector<1x128xf32>
    %c0_24 = arith.constant 0 : index
    %c0_25 = arith.constant 0 : index
    %c1 = arith.constant 1 : index
    %c0_26 = arith.constant 0 : index
    %70 = vector.load %arg5[%c0_24, %c0_25, %c1, %c0_26] : memref<1x1x2x128xf32, #tpu.memory_space<vmem>>, vector<1x1x1x128xf32>
    %71 = vector.shape_cast %70 : vector<1x1x1x128xf32> to vector<1x128xf32>
    %72 = vector.shape_cast %69 : vector<1x128xf32> to vector<1x1x1x128xf32>
    tpu.vector_store %arg5[%c0_24, %c0_25, %c1, %c0_26], %72 {strides = array<i32>} : memref<1x1x2x128xf32, #tpu.memory_space<vmem>>, vector<1x1x1x128xf32>,
    return
  }
  func.func @transform_0(%arg0: i32, %arg1: i32) -> (i32, i32, i32) {
    %c0_i32 = arith.constant 0 : i32
    %c0_i32_0 = arith.constant 0 : i32
    return %arg0, %arg1, %c0_i32 : i32, i32, i32
  }
  func.func @transform_1(%arg0: i32, %arg1: i32) -> (i32, i32, i32, i32) {
    %c0_i32 = arith.constant 0 : i32
    %c0_i32_0 = arith.constant 0 : i32
    %c0_i32_1 = arith.constant 0 : i32
    return %arg0, %c0_i32, %arg1, %c0_i32_0 : i32, i32, i32, i32
  }
  func.func @transform_2(%arg0: i32, %arg1: i32) -> (i32, i32, i32) {
    %c0_i32 = arith.constant 0 : i32
    %c0_i32_0 = arith.constant 0 : i32
    return %arg0, %arg1, %c0_i32 : i32, i32, i32
  }
  func.func @transform_3(%arg0: i32, %arg1: i32) -> (i32, i32, i32, i32) {
    %c0_i32 = arith.constant 0 : i32
    %c0_i32_0 = arith.constant 0 : i32
    %c0_i32_1 = arith.constant 0 : i32
    return %arg0, %arg1, %c0_i32, %c0_i32_0 : i32, i32, i32, i32
  }
}

</mosaic_0001>

<llo_original>
// kernel: tpu_custom_call.1
$region0: #{tpu_custom_call.1}
  #allocation0 [shape = 'u32[]', space=smem, size = 0x4, offset = 0x4, fixed_abs, tag = 'smem constant byte address 0x4 - core index']
  #allocation1 [shape = 'u32[72,128]{1,0:T(1,128)}', space=vmem, size = 0x9000, scoped, tag = 'internal scratch']
  %s0 = inlined_call_operand.hbm [shape: s32[2,2,128], index: 0, kind: input, shape index: {}]
  %s1 = inlined_call_operand.hbm [shape: f32[2,4,2,128], index: 1, kind: input, shape index: {}]
  %s2 = inlined_call_operand.hbm [shape: f32[2,2,128], index: 2, kind: output, shape index: {0}]
  %s3 = inlined_call_operand.hbm [shape: f32[2,1,2,128], index: 3, kind: output, shape index: {1}]
  %4 = xla_tuple %s2, %s3
  %s5 = sld [smem:[#allocation0]]
  $region57: #{tpu_custom_call.1} parent=0
    _
  %s7 = ssub.s32 1, %s5
  %s8 = scalar_select 0, %s7, %s5
  $region1: #{tpu_custom_call.1} parent=0
    #allocation2 [shape = 'u8[2048]{0}', space=vmem, size = 0x800, scoped, tag = 'input window, operand 0']
    #allocation3 [shape = 's32[2]{0}', space=sflag, size = 0x8, scoped, tag = 'scoped memory for tpu_custom_call.1']
    #allocation4 [shape = 's32[2]{0}', space=sflag, size = 0x8, scoped, tag = 'scoped memory for tpu_custom_call.1']
    #allocation5 [shape = 'u8[8192]{0}', space=vmem, size = 0x2000, scoped, tag = 'input window, operand 1']
    #allocation6 [shape = 's32[2]{0}', space=sflag, size = 0x8, scoped, tag = 'scoped memory for tpu_custom_call.1']
    #allocation7 [shape = 'u8[2048]{0}', space=vmem, size = 0x800, scoped, tag = 'output window, operand 0']
    #allocation8 [shape = 'u8[2048]{0}', space=vmem, size = 0x800, scoped, tag = 'output window, operand 1']
    #allocation9 [shape = 's32[2]{0}', space=sflag, size = 0x8, scoped, tag = 'scoped memory for tpu_custom_call.1']
    %9 = vsyncpa [#allocation3], 0
    %s10 = scalar_lea.sflag [#allocation3], 1
    %11 = vsyncpa %s10, 0
    %12 = vsyncpa [#allocation6], 0
    %s13 = scalar_lea.sflag [#allocation6], 1
    %14 = vsyncpa %s13, 0
    %15 = vsyncpa [#allocation4], 0
    %s16 = scalar_lea.sflag [#allocation4], 1
    %17 = vsyncpa %s16, 0
    %18 = vsyncpa [#allocation9], 0
    %s19 = scalar_lea.sflag [#allocation9], 1
    %20 = vsyncpa %s19, 0
    loop: start=0, step=1, limit=4
    $region2: #{tpu_custom_call.1} parent=1 // loop_pre_header
      _
    $region3: #{tpu_custom_call.1} parent=1 // loop_header
      %s22 = sphi 0, %s26
      %p23 = scmp.ge.s32.totalorder %s22, 4
      %s29 = sphi 0, %s41
      %s30 = sphi 0, %s37
      %s31 = sphi 0, %s29
      %s32 = sphi 0, %s30
      %s33 = sphi 0, %s31
      %s34 = sphi 0, %s32
      %s46 = sphi 0, %s48
      %s49 = sphi 0, %s46
      %s50 = sphi 0, %s49
      %s66 = sphi 0, %s50
      %s74 = sphi 0, %s76
      %s77 = sphi 0, %s74
      %s78 = sphi 0, %s77
      %s94 = sphi 0, %s78
      %s102 = sphi 0, %s104
      %s105 = sphi 0, %s102
      %s106 = sphi 0, %s105
      %s122 = sphi 0, %s106
      %s130 = sphi 0, %s132
      %s133 = sphi 0, %s130
      %s134 = sphi 0, %s133
      %s150 = sphi 0, %s134
    $region4: #{tpu_custom_call.1} parent=1 // loop_header_branch
      %25 = sbr.rel (%p23) target = $region8
    $region5: #{tpu_custom_call.1} parent=1 // loop_body
      %s27 = ssub.s32 %s22, 1
      %s28 = ssub.s32 %s22, 2
      %s35 = sadd.s32 1, %s30
      %p36 = scmp.ge.s32.totalorder %s35, 1
      %s37 = scalar_select %p36, 0, %s35
      %s38 = sadd.s32 1, %s29
      %s39 = scalar_select %p36, %s38, %s29
      %p40 = scmp.ge.s32.totalorder %s39, 2
      %s41 = scalar_select %p40, 0, %s39
      %s42 = ssub.s32 %s29, %s41
      %s43 = ssub.s32 %s30, %s37
      %s44 = sor.u32 %s42, %s43
      %p45 = scmp.eq.s32.totalorder %s44, 0
      %s47 = sadd.s32 %s46, 1
      %s48 = scalar_select %p45, %s46, %s47
      %p51 = pneg %p45
      %p52 = scmp.eq.s32.totalorder %s22, 1
      %p53 = por %p51, %p52
      %p54 = scmp.ne.s32.totalorder %s46, %s49
      %p55 = scmp.eq.s32.totalorder %s22, 0
      %p56 = por %p54, %p55
      %p57 = scmp.ne.s32.totalorder %s46, %s49
      %p58 = scmp.eq.s32.totalorder %s27, 1
      %p59 = por %p57, %p58
      %p60 = scmp.ne.s32.totalorder %s49, %s50
      %p61 = scmp.eq.s32.totalorder %s27, 0
      %p62 = por %p60, %p61
      %p63 = scmp.ne.s32.totalorder %s49, %s50
      %p64 = scmp.eq.s32.totalorder %s28, 1
      %p65 = por %p63, %p64
      %p67 = scmp.ne.s32.totalorder %s50, %s66
      %p68 = scmp.eq.s32.totalorder %s28, 0
      %p69 = por %p67, %p68
      %s70 = ssub.s32 %s29, %s41
      %s71 = ssub.s32 %s30, %s37
      %s72 = sor.u32 %s70, %s71
      %p73 = scmp.eq.s32.totalorder %s72, 0
      %s75 = sadd.s32 %s74, 1
      %s76 = scalar_select %p73, %s74, %s75
      %p79 = pneg %p73
      %p80 = scmp.eq.s32.totalorder %s22, 1
      %p81 = por %p79, %p80
      %p82 = scmp.ne.s32.totalorder %s74, %s77
      %p83 = scmp.eq.s32.totalorder %s22, 0
      %p84 = por %p82, %p83
      %p85 = scmp.ne.s32.totalorder %s74, %s77
      %p86 = scmp.eq.s32.totalorder %s27, 1
      %p87 = por %p85, %p86
      %p88 = scmp.ne.s32.totalorder %s77, %s78
      %p89 = scmp.eq.s32.totalorder %s27, 0
      %p90 = por %p88, %p89
      %p91 = scmp.ne.s32.totalorder %s77, %s78
      %p92 = scmp.eq.s32.totalorder %s28, 1
      %p93 = por %p91, %p92
      %p95 = scmp.ne.s32.totalorder %s78, %s94
      %p96 = scmp.eq.s32.totalorder %s28, 0
      %p97 = por %p95, %p96
      %s98 = ssub.s32 %s29, %s41
      %s99 = ssub.s32 %s30, %s37
      %s100 = sor.u32 %s98, %s99
      %p101 = scmp.eq.s32.totalorder %s100, 0
      %s103 = sadd.s32 %s102, 1
      %s104 = scalar_select %p101, %s102, %s103
      %p107 = pneg %p101
      %p108 = scmp.eq.s32.totalorder %s22, 1
      %p109 = por %p107, %p108
      %p110 = scmp.ne.s32.totalorder %s102, %s105
      %p111 = scmp.eq.s32.totalorder %s22, 0
      %p112 = por %p110, %p111
      %p113 = scmp.ne.s32.totalorder %s102, %s105
      %p114 = scmp.eq.s32.totalorder %s27, 1
      %p115 = por %p113, %p114
      %p116 = scmp.ne.s32.totalorder %s105, %s106
      %p117 = scmp.eq.s32.totalorder %s27, 0
      %p118 = por %p116, %p117
      %p119 = scmp.ne.s32.totalorder %s105, %s106
      %p120 = scmp.eq.s32.totalorder %s28, 1
      %p121 = por %p119, %p120
      %p123 = scmp.ne.s32.totalorder %s106, %s122
      %p124 = scmp.eq.s32.totalorder %s28, 0
      %p125 = por %p123, %p124
      %s126 = ssub.s32 %s29, %s41
      %s127 = ssub.s32 %s30, %s37
      %s128 = sor.u32 %s126, %s127
      %p129 = scmp.eq.s32.totalorder %s128, 0
      %s131 = sadd.s32 %s130, 1
      %s132 = scalar_select %p129, %s130, %s131
      %p135 = pneg %p129
      %p136 = scmp.eq.s32.totalorder %s22, 1
      %p137 = por %p135, %p136
      %p138 = scmp.ne.s32.totalorder %s130, %s133
      %p139 = scmp.eq.s32.totalorder %s22, 0
      %p140 = por %p138, %p139
      %p141 = scmp.ne.s32.totalorder %s130, %s133
      %p142 = scmp.eq.s32.totalorder %s27, 1
      %p143 = por %p141, %p142
      %p144 = scmp.ne.s32.totalorder %s133, %s134
      %p145 = scmp.eq.s32.totalorder %s27, 0
      %p146 = por %p144, %p145
      %p147 = scmp.ne.s32.totalorder %s133, %s134
      %p148 = scmp.eq.s32.totalorder %s28, 1
      %p149 = por %p147, %p148
      %p151 = scmp.ne.s32.totalorder %s134, %s150
      %p152 = scmp.eq.s32.totalorder %s28, 0
      %p153 = por %p151, %p152
      %p154 = scmp.le.s32.totalorder 1, %s22
      %p155 = scmp.lt.s32.totalorder %s22, 3
      %p156 = pnand %p154, %p155
      %p157 = pneg %p156
      // Predicated region
      $region9: #{tpu_custom_call.1} parent=5 // pred_check
        _
      $region10: #{tpu_custom_call.1} parent=5 // pred_check_branch
        %159 = sbr.rel (%p156) target = $region12
      $region11: #{tpu_custom_call.1} parent=5 // pred_region
        %s160 = ssub.s32 %s22, 1
      $region12: #{tpu_custom_call.1} parent=5 // pred_fallthru
        _
      %p161 = scmp.lt.s32.totalorder %s22, 2
      // Predicated region
      $region13: #{tpu_custom_call.1} parent=5 // pred_check
        %p162 = pneg %p161
      $region14: #{tpu_custom_call.1} parent=5 // pred_check_branch
        %164 = sbr.rel (%p162) target = $region16
      $region15: #{tpu_custom_call.1} parent=5 // pred_region
        // Predicated region
        $region17: #{tpu_custom_call.1} parent=15 // pred_check
          %p165 = pneg %p56
        $region18: #{tpu_custom_call.1} parent=15 // pred_check_branch
          %167 = sbr.rel (%p165) target = $region20
        $region19: #{tpu_custom_call.1} parent=15 // pred_region
          %s168 = sand.u32 %s46, 1
          %s169 = scalar_lea.sflag [#allocation3], %s168
          %s170 = sand.u32 %s46, 1
          %s171 = smul.addr %s170, 2
          %s172 = scalar_lea.vmem [#allocation2], %s171
          %174 = vsyncadd %s169, 0
          %s175 = sadd.s32 %s30, %s29
          %s176 = smul.addr %s175, 2
          %s177 = scalar_lea.hbm %s0, %s176
          %s179 = sshll.u32 %s177, 4
          %s180 = int_to_ptr.hbm [resolvable:$true] %s179
          %s181 = sshll.u32 %s172, 4
          %s182 = int_to_ptr.vmem [resolvable:$true] %s181
          %184 = dma.hbm_to_vmem [thread:$0]  %s180, 32, %s182, %s169
        $region20: #{tpu_custom_call.1} parent=15 // pred_fallthru
          _
        // Predicated region
        $region21: #{tpu_custom_call.1} parent=15 // pred_check
          %p185 = pneg %p84
        $region22: #{tpu_custom_call.1} parent=15 // pred_check_branch
          %187 = sbr.rel (%p185) target = $region24
        $region23: #{tpu_custom_call.1} parent=15 // pred_region
          %s188 = sand.u32 %s74, 1
          %s189 = scalar_lea.sflag [#allocation6], %s188
          %s190 = sand.u32 %s74, 1
          %s191 = smul.addr %s190, 8
          %s192 = scalar_lea.vmem [#allocation5], %s191
          %194 = vsyncadd %s189, 0
          %s195 = smul.addr %s29, 4
          %s196 = sadd.s32 %s30, %s195
          %s197 = smul.addr %s196, 2
          %s198 = scalar_lea.hbm %s1, %s197
          %s199 = sshll.u32 %s198, 4
          %s200 = int_to_ptr.hbm [resolvable:$true] %s199
          %s201 = sshll.u32 %s192, 4
          %s202 = int_to_ptr.vmem [resolvable:$true] %s201
          %207 = dma.hbm_to_vmem [thread:$0]  %s200, 128, %s202, %s189, 32, 32, 2
        $region24: #{tpu_custom_call.1} parent=15 // pred_fallthru
          _
      $region16: #{tpu_custom_call.1} parent=5 // pred_fallthru
        _
      %p208 = scmp.le.s32.totalorder 1, %s22
      %p209 = scmp.lt.s32.totalorder %s22, 3
      %p210 = pnand %p208, %p209
      %p211 = pneg %p210
      // Predicated region
      $region25: #{tpu_custom_call.1} parent=5 // pred_check
        _
      $region26: #{tpu_custom_call.1} parent=5 // pred_check_branch
        %213 = sbr.rel (%p210) target = $region28
      $region27: #{tpu_custom_call.1} parent=5 // pred_region
        %s214 = ssub.s32 %s22, 1
        %s215 = sand.u32 %s49, 1
        %s216 = scalar_lea.sflag [#allocation3], %s215
        %s217 = sand.u32 %s49, 1
        %s218 = smul.addr %s217, 2
        %s219 = scalar_lea.vmem [#allocation2], %s218
        // Predicated region
        $region29: #{tpu_custom_call.1} parent=27 // pred_check
          %p220 = pneg %p62
        $region30: #{tpu_custom_call.1} parent=27 // pred_check_branch
          %222 = sbr.rel (%p220) target = $region32
        $region31: #{tpu_custom_call.1} parent=27 // pred_region
          %224 = dma.done %s216, 32
        $region32: #{tpu_custom_call.1} parent=27 // pred_fallthru
          _
        %s225 = sand.u32 %s77, 1
        %s226 = scalar_lea.sflag [#allocation6], %s225
        %s227 = sand.u32 %s77, 1
        %s228 = smul.addr %s227, 8
        %s229 = scalar_lea.vmem [#allocation5], %s228
        // Predicated region
        $region33: #{tpu_custom_call.1} parent=27 // pred_check
          %p230 = pneg %p90
        $region34: #{tpu_custom_call.1} parent=27 // pred_check_branch
          %232 = sbr.rel (%p230) target = $region36
        $region35: #{tpu_custom_call.1} parent=27 // pred_region
          %234 = dma.done %s226, 128
        $region36: #{tpu_custom_call.1} parent=27 // pred_fallthru
          _
        %s235 = sand.u32 %s49, 1
        %s236 = scalar_lea.sflag [#allocation3], %s235
        %s237 = sand.u32 %s49, 1
        %s238 = smul.addr %s237, 2
        %s239 = scalar_lea.vmem [#allocation2], %s238
        %p240 = pneg %p62
        %p241 = pneg %p59
        %s242 = sand.u32 %s77, 1
        %s243 = scalar_lea.sflag [#allocation6], %s242
        %s244 = sand.u32 %s77, 1
        %s245 = smul.addr %s244, 8
        %s246 = scalar_lea.vmem [#allocation5], %s245
        %p247 = pneg %p90
        %p248 = pneg %p87
        %p249 = pneg %p118
        %p250 = pneg %p115
        %s251 = sand.u32 %s105, 1
        %s252 = scalar_lea.sflag [#allocation4], %s251
        %s253 = sand.u32 %s105, 1
        %s254 = smul.addr %s253, 2
        %s255 = scalar_lea.vmem [#allocation7], %s254
        %p256 = pneg %p146
        %p257 = pneg %p143
        %s258 = sand.u32 %s133, 1
        %s259 = scalar_lea.sflag [#allocation9], %s258
        %s260 = sand.u32 %s133, 1
        %s261 = smul.addr %s260, 2
        %s262 = scalar_lea.vmem [#allocation8], %s261
        %v263 = vld [vmem:[%s229] sm:$0x3]
        %v264 = vld [vmem:[%s229 + $0x2] sm:$0x3]
        %v265 = vld [vmem:[%s229 + $0x4] sm:$0x3]
        %v266 = vld [vmem:[%s229 + $0x6] sm:$0x3]
        %v267 = vld [vmem:[%s219] sm:$0x3]
        %vm268 = vcmask 1041408
        %v269 = vsel %vm268, %v263, -inf
        %v270 = vsel %vm268, %v264, -inf
        %v271 = vsel %vm268, %v265, -inf
        %v272 = vsel %vm268, %v266, -inf
        %v273 = vmax.f32 %v269, %v270
        %v274 = vmax.f32 %v271, %v272
        %v275 = vmax.f32 %v273, %v274
        %v276 = vsub.f32 %v263, %v275
        %v277 = vmul.f32 %v276, 1.442695
        %v278 = vpow.pop %v277
        %v279 = vadd.f32 %v278, 0.0
        %vm280 = vcmp.eq.s32.totalorder %v267, 0
        %v281 = vsel %vm280, %v263, 0.0
        %v282 = vadd.f32 %v281, 0.0
        %v283 = vsub.f32 %v264, %v275
        %v284 = vmul.f32 %v283, 1.442695
        %v285 = vpow.pop %v284
        %v286 = vadd.f32 %v279, %v285
        %vm287 = vcmp.eq.s32.totalorder %v267, 1
        %v288 = vsel %vm287, %v264, 0.0
        %v289 = vadd.f32 %v282, %v288
        %v290 = vsub.f32 %v265, %v275
        %v291 = vmul.f32 %v290, 1.442695
        %v292 = vpow.pop %v291
        %v293 = vadd.f32 %v286, %v292
        %vm294 = vcmp.eq.s32.totalorder %v267, 2
        %v295 = vsel %vm294, %v265, 0.0
        %v296 = vadd.f32 %v289, %v295
        %v297 = vsub.f32 %v266, %v275
        %v298 = vmul.f32 %v297, 1.442695
        %v299 = vpow.pop %v298
        %v300 = vadd.f32 %v293, %v299
        %vm301 = vcmp.eq.s32.totalorder %v267, 3
        %v302 = vsel %vm301, %v266, 0.0
        %v303 = vadd.f32 %v296, %v302
        %v304 = vlog2.pop %v300
        %v305 = vmul.f32 %v304, 0.6931472
        %v306 = vadd.f32 %v275, %v305
        %v307 = vsub.f32 %v306, %v303
        %vm308 = vcmp.ne.s32.totalorder %v267, 255
        %v309 = vsel %vm308, %v307, 0.0
        %310 = vst [vmem:[%s255] sm:$0x3] %v309
        %vm311 = vcmp.gt.f32.partialorder %v309, 0.35667494
        %v312 = vsel %vm311, %v309, 0.0
        %v313 = vsel %vm268, %v312, 0.0
        %v314 = vrot.slane %v313, 4
        %v315 = vadd.f32 %v313, %v314
        %v316 = vrot.slane %v315, 2
        %v317 = vadd.f32 %v315, %v316
        %v318 = vrot.slane %v317, 1
        %v319 = vadd.f32 %v317, %v318
        %320 = vst [vmem:[%s262] sm:$0x1] %v319
        %v321 = vsel %vm311, 1, 0
        %v322 = vcvt.s32.f32 %v321
        %v323 = vsel %vm268, %v322, 0.0
        %v324 = vrot.slane %v323, 4
        %v325 = vadd.f32 %v323, %v324
        %v326 = vrot.slane %v325, 2
        %v327 = vadd.f32 %v325, %v326
        %v328 = vrot.slane %v327, 1
        %v329 = vadd.f32 %v327, %v328
        %330 = vst [vmem:[%s262 + $0x1] sm:$0x1] %v329
        %s331 = sand.u32 %s105, 1
        %s332 = scalar_lea.sflag [#allocation4], %s331
        %s333 = sand.u32 %s105, 1
        %s334 = smul.addr %s333, 2
        %s335 = scalar_lea.vmem [#allocation7], %s334
        %s336 = sand.u32 %s133, 1
        %s337 = scalar_lea.sflag [#allocation9], %s336
        %s338 = sand.u32 %s133, 1
        %s339 = smul.addr %s338, 2
        %s340 = scalar_lea.vmem [#allocation8], %s339
        // Predicated region
        $region37: #{tpu_custom_call.1} parent=27 // pred_check
          %p341 = pneg %p115
        $region38: #{tpu_custom_call.1} parent=27 // pred_check_branch
          %343 = sbr.rel (%p341) target = $region40
        $region39: #{tpu_custom_call.1} parent=27 // pred_region
          %345 = vsyncadd %s332, 0
          %s346 = sadd.s32 %s32, %s31
          %s347 = smul.addr %s346, 2
          %s348 = scalar_lea.hbm %s2, %s347
          %s350 = sshll.u32 %s335, 4
          %s351 = int_to_ptr.vmem [resolvable:$true] %s350
          %s352 = sshll.u32 %s348, 4
          %s353 = int_to_ptr.hbm [resolvable:$true] %s352
          %355 = dma.vmem_to_hbm [thread:$0]  %s351, 32, %s353, %s332
        $region40: #{tpu_custom_call.1} parent=27 // pred_fallthru
          _
        // Predicated region
        $region41: #{tpu_custom_call.1} parent=27 // pred_check
          %p356 = pneg %p143
        $region42: #{tpu_custom_call.1} parent=27 // pred_check_branch
          %358 = sbr.rel (%p356) target = $region44
        $region43: #{tpu_custom_call.1} parent=27 // pred_region
          %360 = vsyncadd %s337, 0
          %s361 = sadd.s32 %s32, %s31
          %s362 = smul.addr %s361, 2
          %s363 = scalar_lea.hbm %s3, %s362
          %s365 = sshll.u32 %s340, 4
          %s366 = int_to_ptr.vmem [resolvable:$true] %s365
          %s367 = sshll.u32 %s363, 4
          %s368 = int_to_ptr.hbm [resolvable:$true] %s367
          %370 = dma.vmem_to_hbm [thread:$0]  %s366, 32, %s368, %s337
        $region44: #{tpu_custom_call.1} parent=27 // pred_fallthru
          _
      $region28: #{tpu_custom_call.1} parent=5 // pred_fallthru
        _
      %p371 = scmp.le.s32.totalorder 2, %s22
      // Predicated region
      $region45: #{tpu_custom_call.1} parent=5 // pred_check
        %p372 = pneg %p371
      $region46: #{tpu_custom_call.1} parent=5 // pred_check_branch
        %374 = sbr.rel (%p372) target = $region48
      $region47: #{tpu_custom_call.1} parent=5 // pred_region
        %s375 = ssub.s32 %s22, 2
        // Predicated region
        $region49: #{tpu_custom_call.1} parent=47 // pred_check
          %p376 = pneg %p121
        $region50: #{tpu_custom_call.1} parent=47 // pred_check_branch
          %378 = sbr.rel (%p376) target = $region52
        $region51: #{tpu_custom_call.1} parent=47 // pred_region
          %s379 = sand.u32 %s106, 1
          %s380 = scalar_lea.sflag [#allocation4], %s379
          %s381 = sand.u32 %s106, 1
          %s382 = smul.addr %s381, 2
          %s383 = scalar_lea.vmem [#allocation7], %s382
          %385 = dma.done %s380, 32
        $region52: #{tpu_custom_call.1} parent=47 // pred_fallthru
          _
        // Predicated region
        $region53: #{tpu_custom_call.1} parent=47 // pred_check
          %p386 = pneg %p149
        $region54: #{tpu_custom_call.1} parent=47 // pred_check_branch
          %388 = sbr.rel (%p386) target = $region56
        $region55: #{tpu_custom_call.1} parent=47 // pred_region
          %s389 = sand.u32 %s134, 1
          %s390 = scalar_lea.sflag [#allocation9], %s389
          %s391 = sand.u32 %s134, 1
          %s392 = smul.addr %s391, 2
          %s393 = scalar_lea.vmem [#allocation8], %s392
          %395 = dma.done %s390, 32
        $region56: #{tpu_custom_call.1} parent=47 // pred_fallthru
          _
      $region48: #{tpu_custom_call.1} parent=5 // pred_fallthru
        _
    $region6: #{tpu_custom_call.1} parent=1 // loop_footer
      %s26 = sadd.s32 1, %s22
    $region7: #{tpu_custom_call.1} parent=1 // loop_footer_branch
      %21 = sbr.rel target = $region3
    $region8: #{tpu_custom_call.1} parent=1 // loop_exit
      _
    %396 = vsyncpa [#allocation3], 1
    %s397 = scalar_lea.sflag [#allocation3], 1
    %398 = vsyncpa %s397, 1
    %399 = vsyncpa [#allocation6], 1
    %s400 = scalar_lea.sflag [#allocation6], 1
    %401 = vsyncpa %s400, 1
    %402 = vsyncpa [#allocation4], 1
    %s403 = scalar_lea.sflag [#allocation4], 1
    %404 = vsyncpa %s403, 1
    %405 = vsyncpa [#allocation9], 1
    %s406 = scalar_lea.sflag [#allocation9], 1
    %407 = vsyncpa %s406, 1

</llo_original>
